<compile_context>
chip_gen: v7x
topology: tpu7x:2x2x1
jax: 0.10.0
libtpu: 0.0.40
codegen_flags: <defaults>
</compile_context>

<pallas_src>
import numpy as np
import jax
import jax.numpy as jnp
from jax import lax
from jax.experimental import pallas as pl
from jax.experimental.pallas import tpu as pltpu


_PAD_MODE = {"reflect": "reflect", "refl": "reflect",
             "repl": "edge", "replicate": "edge", "zero": "constant"}

_BINOMIAL = {
    1: [1.0],
    2: [1.0, 1.0],
    3: [1.0, 2.0, 1.0],
    4: [1.0, 3.0, 3.0, 1.0],
    5: [1.0, 4.0, 6.0, 4.0, 1.0],
    6: [1.0, 5.0, 10.0, 10.0, 5.0, 1.0],
    7: [1.0, 6.0, 15.0, 20.0, 15.0, 6.0, 1.0],
}


def _binomial_1d(filt_size: int) -> np.ndarray:
    a = np.asarray(_BINOMIAL[filt_size], dtype=np.float64)
    # outer(a,a)/sum == outer(a/Σa, a/Σa) -> separable, normalized
    return (a / a.sum()).astype(np.float32)


def _ru(x: int, m: int) -> int:
    return ((x + m - 1) // m) * m


def _pad_src(q: int, n: int, mode: str):
    """Map a padded-coordinate index q to an unpadded source index, or None if
    the tap falls on an implicit zero (zero padding)."""
    if 0 <= q < n:
        return q
    if mode == "reflect":            # ReflectionPad2d (no edge repeat)
        return -q if q < 0 else 2 * (n - 1) - q
    if mode == "edge":               # ReplicationPad2d
        return 0 if q < 0 else n - 1
    return None                      # ZeroPad2d


def _wpass_matrix(taps, W, Wo, Wo_pad, stride, pad_a, mode) -> np.ndarray:
    """B^T of shape (W, Wo_pad): out[:, j] = Σ_k taps[k] * x[:, src(j*stride+k-pad_a)].

    W-direction padding is folded in (reflected/clamped source columns get the
    boundary taps added); columns >= Wo are zero so the kernel output stays
    lane-dense (Wo_pad is a multiple of 128 -> unmasked stores, aligned MXU N)."""
    bt = np.zeros((W, Wo_pad), dtype=np.float32)
    for j in range(Wo):
        for k, w in enumerate(taps):
            src = _pad_src(j * stride + k - pad_a, W, mode)
            if src is not None:
                bt[src, j] += w
    return bt


def _hpass_plan(taps, H, Ho, filt_size, stride, pad_a, mode):
    """Interior output rows [i_lo, i_hi) are handled with strided sublane
    slices of the unpadded input; the few boundary rows get explicit
    (source-row, weight) terms with the H padding pre-resolved."""
    i_lo = min(Ho, -(-pad_a // stride))                                   # ceil
    i_hi = max(i_lo, min(Ho, (H - filt_size + pad_a) // stride + 1))
    boundary = []
    for i in list(range(0, i_lo)) + list(range(i_hi, Ho)):
        terms = {}
        for k, w in enumerate(taps):
            src = _pad_src(i * stride + k - pad_a, H, mode)
            if src is not None:
                terms[src] = terms.get(src, 0.0) + w
        boundary.append((i, sorted(terms.items())))
    return i_lo, i_hi, boundary


def _vmem_capacity_bytes() -> int:
    try:
        return int(pltpu.get_tpu_info().vmem_capacity_bytes)
    except Exception:                       # no query available -> be conservative
        return 64 * 1024 * 1024             # v7x per-TensorCore size


def _pick_tb(nc, H, W, Ho, Wo_pad, in_isz, out_isz, mm_isz, budget, min_steps):
    """Planes per grid step: the largest divisor of nc (-> no tail padding, no
    ragged block) that fits the VMEM budget and keeps >= min_steps grid steps
    so the input DMA / output writeback overlap neighboring blocks."""
    def tile(rows, cols, isz):              # dtype-aware sublane packing
        sub = max(8, 32 // max(isz, 1))     # 8 for f32, 16 for bf16, 32 for int8
        return _ru(rows, sub) * _ru(cols, 128) * isz

    per_plane = (2 * tile(H, W, in_isz)             # input block, double-buffered
                 + 2 * tile(Ho, Wo_pad, out_isz)    # output block, double-buffered
                 + tile(Ho, W, 4))                  # f32 H-pass scratch
    fixed = 2 * tile(W, Wo_pad, mm_isz)             # B^T (budgeted x2 to be safe)
    tb_mem = max(1, (budget - fixed) // per_plane)
    tb_grid = max(1, nc // min_steps)
    cap = int(max(1, min(tb_mem, tb_grid, nc)))
    for d in range(cap, 0, -1):
        if nc % d == 0:
            return d
    return 1


def _make_kernel(TB, W, Ho, Wo_pad, filt_size, stride, taps,
                 i_lo, n_int, int_start, boundary, mm_dtype):
    def rows(ref, start, n):
        if stride == 1:
            return ref[:, pl.ds(start, n), :]
        return ref[:, pl.ds(start, n, stride=stride), :]

    def kernel(bt_ref, x_ref, o_ref, z_ref):
        # bt_ref: (W, Wo_pad)  resident W-pass matrix (padding folded, lane-dense)
        # x_ref : (TB, H, W)   unpadded input planes
        # o_ref : (TB, Ho, Wo_pad)
        # z_ref : (TB, Ho, W)  f32 H-pass scratch
        # ---- H-pass (VPU): binomial blur + stride-s subsample along H,
        # vectorized over all TB planes (no per-plane Python loop).
        if n_int > 0:
            acc = taps[0] * rows(x_ref, int_start, n_int).astype(jnp.float32)
            for k in range(1, filt_size):
                acc = acc + taps[k] * rows(x_ref, int_start + k, n_int).astype(jnp.float32)
            z_ref[:, pl.ds(i_lo, n_int), :] = acc
        # Boundary output rows: padding resolved at build time into explicit
        # (source-row, weight) terms on the unpadded input.
        for i, terms in boundary:
            if terms:
                src0, w0 = terms[0]
                acc = w0 * x_ref[:, pl.ds(src0, 1), :].astype(jnp.float32)
                for src, w in terms[1:]:
                    acc = acc + w * x_ref[:, pl.ds(src, 1), :].astype(jnp.float32)
            else:  # zero padding can leave a row with no in-range taps
                acc = jnp.zeros((TB, 1, W), jnp.float32)
            z_ref[:, pl.ds(i, 1), :] = acc
        # ---- W-pass (MXU): one matmul for the whole block against B^T.
        z = z_ref[...]
        if Ho % 8 == 0:
            z2 = z.reshape(TB * Ho, W)      # pure relabel (Ho is sublane-aligned)
            out = jnp.dot(z2.astype(mm_dtype), bt_ref[...],
                          preferred_element_type=jnp.float32)
            o_ref[...] = out.reshape(TB, Ho, Wo_pad).astype(o_ref.dtype)
        else:
            # Ho not sublane-aligned: fall back to per-plane 2-D matmuls.
            for t in range(TB):
                out_t = jnp.dot(z[t].astype(mm_dtype), bt_ref[...],
                                preferred_element_type=jnp.float32)
                o_ref[pl.ds(t, 1), :, :] = out_t[None].astype(o_ref.dtype)

    return kernel


def downsample(x, *, filt_size: int = 3, stride: int = 2,
               pad_type: str = "reflect", pad_off: int = 0,
               w_pass_bf16: bool = False):
    """Equivalent of Downsample(pad_type, filt_size, stride, channels=C).forward(x)."""
    N, C, H, W = x.shape
    pad_a = int(1.0 * (filt_size - 1) / 2) + pad_off
    pad_b = int(np.ceil(1.0 * (filt_size - 1) / 2)) + pad_off
    mode = _PAD_MODE[pad_type]

    # Module short-circuit: no blur for filt_size == 1 (pure JAX strided slice).
    if filt_size == 1:
        if pad_off == 0:
            return x[:, :, ::stride, ::stride]
        xp = jnp.pad(x, ((0, 0), (0, 0), (pad_a, pad_b), (pad_a, pad_b)), mode=mode)
        return xp[:, :, ::stride, ::stride]

    if mode == "reflect":
        assert H > pad_b and W > pad_b, "reflect padding needs H, W > pad width"

    Ho = (H + pad_a + pad_b - filt_size) // stride + 1
    Wo = (W + pad_a + pad_b - filt_size) // stride + 1
    assert Ho >= 1 and Wo >= 1
    Wo_pad = _ru(Wo, 128)                       # lane-dense output

    taps = [float(v) for v in _binomial_1d(filt_size)]
    mm_dtype = jnp.bfloat16 if w_pass_bf16 else jnp.float32
    bt = jnp.asarray(_wpass_matrix(taps, W, Wo, Wo_pad, stride, pad_a, mode),
                     dtype=mm_dtype)

    i_lo, i_hi, boundary = _hpass_plan(taps, H, Ho, filt_size, stride, pad_a, mode)
    n_int = i_hi - i_lo
    int_start = i_lo * stride - pad_a

    # Generation-aware sizing: 128 MiB parts (v5e/v6e) vs 64 MiB/TC (v7x).
    vmem_cap = _vmem_capacity_bytes()
    if vmem_cap >= 100 * 1024 * 1024:
        budget, vmem_limit, min_steps = 84 << 20, 100 << 20, 3
    else:
        budget, vmem_limit, min_steps = 32 << 20, 42 << 20, 6

    NC = N * C
    TB = _pick_tb(NC, H, W, Ho, Wo_pad,
                  in_isz=x.dtype.itemsize, out_isz=x.dtype.itemsize,
                  mm_isz=jnp.dtype(mm_dtype).itemsize,
                  budget=budget, min_steps=min_steps)
    G = NC // TB

    x3 = x.reshape(NC, H, W)                    # free reshape; NO padded HBM copy
    kernel = _make_kernel(TB, W, Ho, Wo_pad, filt_size, stride, taps,
                          i_lo, n_int, int_start, boundary, mm_dtype)

    def run(bt_single_buffered):
        if bt_single_buffered:
            # B^T never changes across grid steps -> request a single VMEM buffer.
            bt_spec = pl.BlockSpec((W, Wo_pad), lambda i: (0, 0),
                                   pipeline_mode=pl.Buffered(1))
        else:
            bt_spec = pl.BlockSpec((W, Wo_pad), lambda i: (0, 0))
        return pl.pallas_call(
            kernel,
            out_shape=jax.ShapeDtypeStruct((NC, Ho, Wo_pad), x.dtype),
            grid=(G,),
            in_specs=[bt_spec,
                      pl.BlockSpec((TB, H, W), lambda i: (i, 0, 0))],
            out_specs=pl.BlockSpec((TB, Ho, Wo_pad), lambda i: (i, 0, 0)),
            scratch_shapes=[pltpu.VMEM((TB, Ho, W), jnp.float32)],
            compiler_params=pltpu.CompilerParams(
                dimension_semantics=("parallel",),
                vmem_limit_bytes=int(vmem_limit)),
        )(bt, x3)

    try:
        out3 = run(True)
    except Exception:   # pl.Buffered(1) unsupported -> default double-buffered spec
        out3 = run(False)

    return out3[:, :, :Wo].reshape(N, C, Ho, Wo)


def _reference_downsample(x, *, filt_size=3, stride=2, pad_type="reflect", pad_off=0):
    """Pure-JAX/XLA reference mirroring the PyTorch forward (pad + grouped conv)."""
    N, C, H, W = x.shape
    pad_a = int(1.0 * (filt_size - 1) / 2) + pad_off
    pad_b = int(np.ceil(1.0 * (filt_size - 1) / 2)) + pad_off
    mode = _PAD_MODE[pad_type]
    if filt_size == 1:
        if pad_off == 0:
            return x[:, :, ::stride, ::stride]
        xp = jnp.pad(x, ((0, 0), (0, 0), (pad_a, pad_b), (pad_a, pad_b)), mode=mode)
        return xp[:, :, ::stride, ::stride]
    xp = jnp.pad(x, ((0, 0), (0, 0), (pad_a, pad_b), (pad_a, pad_b)), mode=mode)
    a = _binomial_1d(filt_size)
    filt2d = np.outer(a, a).astype(np.float32)
    w = jnp.asarray(np.tile(filt2d[None, None], (C, 1, 1, 1)))   # depthwise (C,1,k,k)
    out = lax.conv_general_dilated(
        xp.astype(jnp.float32), w, window_strides=(stride, stride), padding="VALID",
        dimension_numbers=("NCHW", "OIHW", "NCHW"), feature_group_count=C)
    return out.astype(x.dtype)


if __name__ == "__main__":
    key = jax.random.PRNGKey(0)
    N, C = 2, 4

    configs = [
        # (filt_size, stride, pad_type, H, W, w_pass_bf16, tol)
        (3, 2, "reflect", 16, 16, False, 1e-5),   # canonical blur-pool config
        (5, 2, "reflect", 16, 24, False, 1e-5),   # top+bottom H boundaries, non-square
        (4, 2, "zero",    16, 16, False, 1e-5),   # even filter, asymmetric zero pad
        (3, 3, "reflect", 24, 24, False, 1e-5),   # stride-3 strided row slices
        (3, 2, "reflect", 16, 16, True,  2e-2),   # bf16 W-pass (MXU relief on v5e)
    ]
    for idx, (fs, st, pt, H, W, use_bf16, tol) in enumerate(configs):
        x = jax.random.normal(jax.random.fold_in(key, idx), (N, C, H, W), jnp.float32)
        out = jax.block_until_ready(
            downsample(x, filt_size=fs, stride=st, pad_type=pt, w_pass_bf16=use_bf16))
        ref = jax.block_until_ready(
            _reference_downsample(x, filt_size=fs, stride=st, pad_type=pt))
        assert out.shape == ref.shape, (out.shape, ref.shape)
        if idx == 0:
            assert out.shape == (N, C, 8, 8), out.shape
        np.testing.assert_allclose(np.asarray(out), np.asarray(ref), rtol=tol, atol=tol)

    # filt_size == 1 shortcut path (no kernel needed).
    x = jax.random.normal(key, (N, C, 16, 16), jnp.float32)
    o1 = downsample(x, filt_size=1, stride=2)
    np.testing.assert_allclose(np.asarray(o1), np.asarray(x[:, :, ::2, ::2]))

    print("KERNEL_OK")
</pallas_src>

<mosaic_0001>
module attributes {stable_mosaic.version = 11 : i64} {
  func.func @kernel(%arg0: i32, %arg1: memref<16x128xf32, #tpu.memory_space<vmem>>, %arg2: memref<1x16x16xf32, #tpu.memory_space<vmem>>, %arg3: memref<1x8x128xf32, #tpu.memory_space<vmem>>, %arg4: memref<1x8x16xf32, #tpu.memory_space<vmem>>) attributes {dimension_semantics = [#tpu.dimension_semantics<parallel>], iteration_bounds = array<i64: 8>, scalar_prefetch = 0 : i64, scratch_operands = 1 : i64, tpu.core_type = #tpu.core_type<tc>, window_params = [{pipeline_mode = #tpu.pipeline_mode<synchronous>, transform_indices = @transform_0, window_bounds = array<i64: 16, 128>}, {transform_indices = @transform_1, window_bounds = array<i64: 1, 16, 16>}, {transform_indices = @transform_2, window_bounds = array<i64: 1, 8, 128>}]} {
    %c0 = arith.constant 0 : index
    %c1 = arith.constant 1 : index
    %c0_0 = arith.constant 0 : index
    %0 = tpu.strided_load %arg2[%c0, %c1, %c0_0] {strides = array<i32: 1, 2, 1>} : memref<1x16x16xf32, #tpu.memory_space<vmem>>, vector<1x7x16xf32>
    %cst = arith.constant 2.500000e-01 : f32
    %1 = vector.broadcast %cst : f32 to vector<1x7x16xf32>
    %2 = arith.mulf %1, %0 : vector<1x7x16xf32>
    %c0_1 = arith.constant 0 : index
    %c2 = arith.constant 2 : index
    %c0_2 = arith.constant 0 : index
    %3 = tpu.strided_load %arg2[%c0_1, %c2, %c0_2] {strides = array<i32: 1, 2, 1>} : memref<1x16x16xf32, #tpu.memory_space<vmem>>, vector<1x7x16xf32>
    %cst_3 = arith.constant 5.000000e-01 : f32
    %4 = vector.broadcast %cst_3 : f32 to vector<1x7x16xf32>
    %5 = arith.mulf %4, %3 : vector<1x7x16xf32>
    %6 = arith.addf %2, %5 : vector<1x7x16xf32>
    %c0_4 = arith.constant 0 : index
    %c3 = arith.constant 3 : index
    %c0_5 = arith.constant 0 : index
    %7 = tpu.strided_load %arg2[%c0_4, %c3, %c0_5] {strides = array<i32: 1, 2, 1>} : memref<1x16x16xf32, #tpu.memory_space<vmem>>, vector<1x7x16xf32>
    %cst_6 = arith.constant 2.500000e-01 : f32
    %8 = vector.broadcast %cst_6 : f32 to vector<1x7x16xf32>
    %9 = arith.mulf %8, %7 : vector<1x7x16xf32>
    %10 = arith.addf %6, %9 : vector<1x7x16xf32>
    %c0_7 = arith.constant 0 : index
    %c1_8 = arith.constant 1 : index
    %c0_9 = arith.constant 0 : index
    %11 = vector.load %arg4[%c0_7, %c1_8, %c0_9] : memref<1x8x16xf32, #tpu.memory_space<vmem>>, vector<1x7x16xf32>
    tpu.vector_store %arg4[%c0_7, %c1_8, %c0_9], %10 {strides = array<i32>} : memref<1x8x16xf32, #tpu.memory_space<vmem>>, vector<1x7x16xf32>,
    %c0_10 = arith.constant 0 : index
    %c0_11 = arith.constant 0 : index
    %c0_12 = arith.constant 0 : index
    %12 = vector.load %arg2[%c0_10, %c0_11, %c0_12] : memref<1x16x16xf32, #tpu.memory_space<vmem>>, vector<1x1x16xf32>
    %cst_13 = arith.constant 5.000000e-01 : f32
    %13 = vector.broadcast %cst_13 : f32 to vector<1x1x16xf32>
    %14 = arith.mulf %13, %12 : vector<1x1x16xf32>
    %c0_14 = arith.constant 0 : index
    %c1_15 = arith.constant 1 : index
    %c0_16 = arith.constant 0 : index
    %15 = vector.load %arg2[%c0_14, %c1_15, %c0_16] : memref<1x16x16xf32, #tpu.memory_space<vmem>>, vector<1x1x16xf32>
    %cst_17 = arith.constant 5.000000e-01 : f32
    %16 = vector.broadcast %cst_17 : f32 to vector<1x1x16xf32>
    %17 = arith.mulf %16, %15 : vector<1x1x16xf32>
    %18 = arith.addf %14, %17 : vector<1x1x16xf32>
    %c0_18 = arith.constant 0 : index
    %c0_19 = arith.constant 0 : index
    %c0_20 = arith.constant 0 : index
    %19 = vector.load %arg4[%c0_18, %c0_19, %c0_20] : memref<1x8x16xf32, #tpu.memory_space<vmem>>, vector<1x1x16xf32>
    tpu.vector_store %arg4[%c0_18, %c0_19, %c0_20], %18 {strides = array<i32>} : memref<1x8x16xf32, #tpu.memory_space<vmem>>, vector<1x1x16xf32>,
    %c0_21 = arith.constant 0 : index
    %c0_22 = arith.constant 0 : index
    %c0_23 = arith.constant 0 : index
    %20 = vector.load %arg4[%c0_21, %c0_22, %c0_23] : memref<1x8x16xf32, #tpu.memory_space<vmem>>, vector<1x8x16xf32>
    %21 = vector.shape_cast %20 : vector<1x8x16xf32> to vector<8x16xf32>
    %c0_24 = arith.constant 0 : index
    %c0_25 = arith.constant 0 : index
    %22 = vector.load %arg1[%c0_24, %c0_25] : memref<16x128xf32, #tpu.memory_space<vmem>>, vector<16x128xf32>
    %cst_26 = arith.constant dense<0.000000e+00> : vector<8x128xf32>
    %23 = tpu.matmul %21, %22, %cst_26 {dimension_numbers = #tpu.dot_dimension_numbers<[1], [0], [0], [1], [0, 0, 1, 1], [], []>} : vector<8x16xf32>, vector<16x128xf32>, vector<8x128xf32> -> vector<8x128xf32>
    %24 = vector.shape_cast %23 : vector<8x128xf32> to vector<1x8x128xf32>
    %c0_27 = arith.constant 0 : index
    %c0_28 = arith.constant 0 : index
    %c0_29 = arith.constant 0 : index
    %25 = vector.load %arg3[%c0_27, %c0_28, %c0_29] : memref<1x8x128xf32, #tpu.memory_space<vmem>>, vector<1x8x128xf32>
    tpu.vector_store %arg3[%c0_27, %c0_28, %c0_29], %24 {strides = array<i32>} : memref<1x8x128xf32, #tpu.memory_space<vmem>>, vector<1x8x128xf32>,
    return
  }
  func.func @transform_0(%arg0: i32) -> (i32, i32) {
    %c0_i32 = arith.constant 0 : i32
    %c0_i32_0 = arith.constant 0 : i32
    %c0_i32_1 = arith.constant 0 : i32
    return %c0_i32, %c0_i32_0 : i32, i32
  }
  func.func @transform_1(%arg0: i32) -> (i32, i32, i32) {
    %c0_i32 = arith.constant 0 : i32
    %c0_i32_0 = arith.constant 0 : i32
    %c0_i32_1 = arith.constant 0 : i32
    return %arg0, %c0_i32, %c0_i32_0 : i32, i32, i32
  }
  func.func @transform_2(%arg0: i32) -> (i32, i32, i32) {
    %c0_i32 = arith.constant 0 : i32
    %c0_i32_0 = arith.constant 0 : i32
    %c0_i32_1 = arith.constant 0 : i32
    return %arg0, %c0_i32, %c0_i32_0 : i32, i32, i32
  }
}

module attributes {stable_mosaic.version = 11 : i64} {
  func.func @kernel(%arg0: i32, %arg1: memref<16x128xf32, #tpu.memory_space<vmem>>, %arg2: memref<1x16x16xf32, #tpu.memory_space<vmem>>, %arg3: memref<1x8x128xf32, #tpu.memory_space<vmem>>, %arg4: memref<1x8x16xf32, #tpu.memory_space<vmem>>) attributes {dimension_semantics = [#tpu.dimension_semantics<parallel>], iteration_bounds = array<i64: 8>, scalar_prefetch = 0 : i64, scratch_operands = 1 : i64, tpu.core_type = #tpu.core_type<tc>, window_params = [{pipeline_mode = #tpu.pipeline_mode<synchronous>, transform_indices = @transform_0, window_bounds = array<i64: 16, 128>}, {transform_indices = @transform_1, window_bounds = array<i64: 1, 16, 16>}, {transform_indices = @transform_2, window_bounds = array<i64: 1, 8, 128>}]} {
    %c0 = arith.constant 0 : index
    %c1 = arith.constant 1 : index
    %c0_0 = arith.constant 0 : index
    %0 = tpu.strided_load %arg2[%c0, %c1, %c0_0] {strides = array<i32: 1, 2, 1>} : memref<1x16x16xf32, #tpu.memory_space<vmem>>, vector<1x7x16xf32>
    %cst = arith.constant 2.500000e-01 : f32
    %1 = vector.broadcast %cst : f32 to vector<1x7x16xf32>
    %2 = arith.mulf %1, %0 : vector<1x7x16xf32>
    %c0_1 = arith.constant 0 : index
    %c2 = arith.constant 2 : index
    %c0_2 = arith.constant 0 : index
    %3 = tpu.strided_load %arg2[%c0_1, %c2, %c0_2] {strides = array<i32: 1, 2, 1>} : memref<1x16x16xf32, #tpu.memory_space<vmem>>, vector<1x7x16xf32>
    %cst_3 = arith.constant 5.000000e-01 : f32
    %4 = vector.broadcast %cst_3 : f32 to vector<1x7x16xf32>
    %5 = arith.mulf %4, %3 : vector<1x7x16xf32>
    %6 = arith.addf %2, %5 : vector<1x7x16xf32>
    %c0_4 = arith.constant 0 : index
    %c3 = arith.constant 3 : index
    %c0_5 = arith.constant 0 : index
    %7 = tpu.strided_load %arg2[%c0_4, %c3, %c0_5] {strides = array<i32: 1, 2, 1>} : memref<1x16x16xf32, #tpu.memory_space<vmem>>, vector<1x7x16xf32>
    %cst_6 = arith.constant 2.500000e-01 : f32
    %8 = vector.broadcast %cst_6 : f32 to vector<1x7x16xf32>
    %9 = arith.mulf %8, %7 : vector<1x7x16xf32>
    %10 = arith.addf %6, %9 : vector<1x7x16xf32>
    %c0_7 = arith.constant 0 : index
    %c1_8 = arith.constant 1 : index
    %c0_9 = arith.constant 0 : index
    %11 = vector.load %arg4[%c0_7, %c1_8, %c0_9] : memref<1x8x16xf32, #tpu.memory_space<vmem>>, vector<1x7x16xf32>
    tpu.vector_store %arg4[%c0_7, %c1_8, %c0_9], %10 {strides = array<i32>} : memref<1x8x16xf32, #tpu.memory_space<vmem>>, vector<1x7x16xf32>,
    %c0_10 = arith.constant 0 : index
    %c0_11 = arith.constant 0 : index
    %c0_12 = arith.constant 0 : index
    %12 = vector.load %arg2[%c0_10, %c0_11, %c0_12] : memref<1x16x16xf32, #tpu.memory_space<vmem>>, vector<1x1x16xf32>
    %cst_13 = arith.constant 5.000000e-01 : f32
    %13 = vector.broadcast %cst_13 : f32 to vector<1x1x16xf32>
    %14 = arith.mulf %13, %12 : vector<1x1x16xf32>
    %c0_14 = arith.constant 0 : index
    %c1_15 = arith.constant 1 : index
    %c0_16 = arith.constant 0 : index
    %15 = vector.load %arg2[%c0_14, %c1_15, %c0_16] : memref<1x16x16xf32, #tpu.memory_space<vmem>>, vector<1x1x16xf32>
    %cst_17 = arith.constant 5.000000e-01 : f32
    %16 = vector.broadcast %cst_17 : f32 to vector<1x1x16xf32>
    %17 = arith.mulf %16, %15 : vector<1x1x16xf32>
    %18 = arith.addf %14, %17 : vector<1x1x16xf32>
    %c0_18 = arith.constant 0 : index
    %c0_19 = arith.constant 0 : index
    %c0_20 = arith.constant 0 : index
    %19 = vector.load %arg4[%c0_18, %c0_19, %c0_20] : memref<1x8x16xf32, #tpu.memory_space<vmem>>, vector<1x1x16xf32>
    tpu.vector_store %arg4[%c0_18, %c0_19, %c0_20], %18 {strides = array<i32>} : memref<1x8x16xf32, #tpu.memory_space<vmem>>, vector<1x1x16xf32>,
    %c0_21 = arith.constant 0 : index
    %c0_22 = arith.constant 0 : index
    %c0_23 = arith.constant 0 : index
    %20 = vector.load %arg4[%c0_21, %c0_22, %c0_23] : memref<1x8x16xf32, #tpu.memory_space<vmem>>, vector<1x8x16xf32>
    %21 = vector.shape_cast %20 : vector<1x8x16xf32> to vector<8x16xf32>
    %c0_24 = arith.constant 0 : index
    %c0_25 = arith.constant 0 : index
    %22 = vector.load %arg1[%c0_24, %c0_25] : memref<16x128xf32, #tpu.memory_space<vmem>>, vector<16x128xf32>
    %cst_26 = arith.constant dense<0.000000e+00> : vector<8x128xf32>
    %23 = tpu.matmul %21, %22, %cst_26 {dimension_numbers = #tpu.dot_dimension_numbers<[1], [0], [0], [1], [0, 0, 1, 1], [], []>} : vector<8x16xf32>, vector<16x128xf32>, vector<8x128xf32> -> vector<8x128xf32>
    %24 = vector.shape_cast %23 : vector<8x128xf32> to vector<1x8x128xf32>
    %c0_27 = arith.constant 0 : index
    %c0_28 = arith.constant 0 : index
    %c0_29 = arith.constant 0 : index
    %25 = vector.load %arg3[%c0_27, %c0_28, %c0_29] : memref<1x8x128xf32, #tpu.memory_space<vmem>>, vector<1x8x128xf32>
    tpu.vector_store %arg3[%c0_27, %c0_28, %c0_29], %24 {strides = array<i32>} : memref<1x8x128xf32, #tpu.memory_space<vmem>>, vector<1x8x128xf32>,
    return
  }
  func.func @transform_0(%arg0: i32) -> (i32, i32) {
    %c0_i32 = arith.constant 0 : i32
    %c0_i32_0 = arith.constant 0 : i32
    %c0_i32_1 = arith.constant 0 : i32
    return %c0_i32, %c0_i32_0 : i32, i32
  }
  func.func @transform_1(%arg0: i32) -> (i32, i32, i32) {
    %c0_i32 = arith.constant 0 : i32
    %c0_i32_0 = arith.constant 0 : i32
    %c0_i32_1 = arith.constant 0 : i32
    return %arg0, %c0_i32, %c0_i32_0 : i32, i32, i32
  }
  func.func @transform_2(%arg0: i32) -> (i32, i32, i32) {
    %c0_i32 = arith.constant 0 : i32
    %c0_i32_0 = arith.constant 0 : i32
    %c0_i32_1 = arith.constant 0 : i32
    return %arg0, %c0_i32, %c0_i32_0 : i32, i32, i32
  }
}

</mosaic_0001>

<llo_original>
// kernel: tpu_custom_call.1
$region0: #{tpu_custom_call.1}
  #allocation0 [shape = 'u32[]', space=smem, size = 0x4, offset = 0x4, fixed_abs, tag = 'smem constant byte address 0x4 - core index']
  #allocation1 [shape = 'u32[144,128]{1,0:T(1,128)}', space=vmem, size = 0x12000, scoped, tag = 'internal scratch']
  #allocation2 [shape = 'f32[1,8,16]{2,1,0:T(8,128)}', space=vmem, size = 0x1000, scoped, tag = 'scratch operand']
  %s0 = inlined_call_operand.hbm [shape: f32[16,128], index: 0, kind: input, shape index: {}]
  %s1 = inlined_call_operand.hbm [shape: f32[8,16,16], index: 1, kind: input, shape index: {}]
  %s2 = inlined_call_operand.hbm [shape: f32[8,8,128], index: 2, kind: output, shape index: {}]
  %s3 = sld [smem:[#allocation0]]
  $region49: #{tpu_custom_call.1} parent=0
    _
  %s5 = ssub.s32 1, %s3
  %s6 = scalar_select 0, %s5, %s3
  $region1: #{tpu_custom_call.1} parent=0
    #allocation3 [shape = 'u8[8192]{0}', space=vmem, size = 0x2000, scoped, tag = 'input window, operand 0, single buffered']
    #allocation4 [shape = 's32[2]{0}', space=sflag, size = 0x8, scoped, tag = 'scoped memory for tpu_custom_call.1']
    #allocation5 [shape = 's32[2]{0}', space=sflag, size = 0x8, scoped, tag = 'scoped memory for tpu_custom_call.1']
    #allocation6 [shape = 'u8[16384]{0}', space=vmem, size = 0x4000, scoped, tag = 'input window, operand 1']
    #allocation7 [shape = 's32[2]{0}', space=sflag, size = 0x8, scoped, tag = 'scoped memory for tpu_custom_call.1']
    #allocation8 [shape = 'u8[8192]{0}', space=vmem, size = 0x2000, scoped, tag = 'output window, operand 0']
    %7 = vsyncpa [#allocation4], 0
    %8 = vsyncpa [#allocation7], 0
    %s9 = scalar_lea.sflag [#allocation7], 1
    %10 = vsyncpa %s9, 0
    %11 = vsyncpa [#allocation5], 0
    %s12 = scalar_lea.sflag [#allocation5], 1
    %13 = vsyncpa %s12, 0
    loop: start=0, step=1, limit=10
    $region2: #{tpu_custom_call.1} parent=1 // loop_pre_header
      _
    $region3: #{tpu_custom_call.1} parent=1 // loop_header
      %s15 = sphi 0, %s19
      %p16 = scmp.ge.s32.totalorder %s15, 10
      %s23 = sphi 0, %s23
      %s25 = sphi 0, %s23
      %s26 = sphi 0, %s25
      %s40 = sphi 0, %s26
      %s46 = sphi 0, %s48
      %s49 = sphi 0, %s46
      %s50 = sphi 0, %s49
      %s66 = sphi 0, %s50
      %s72 = sphi 0, %s74
      %s75 = sphi 0, %s72
      %s76 = sphi 0, %s75
      %s92 = sphi 0, %s76
    $region4: #{tpu_custom_call.1} parent=1 // loop_header_branch
      %18 = sbr.rel (%p16) target = $region8
    $region5: #{tpu_custom_call.1} parent=1 // loop_body
      %s20 = ssub.s32 %s15, 1
      %s21 = ssub.s32 %s15, 2
      %s22 = sadd.s32 %s15, 1
      %s24 = sadd.s32 %s23, 1
      %p27 = scmp.eq.s32.totalorder %s15, 7
      %p28 = scmp.ne.s32.totalorder %s23, %s25
      %p29 = scmp.eq.s32.totalorder %s15, 0
      %p30 = por %p28, %p29
      %p31 = scmp.ne.s32.totalorder %s23, %s25
      %p32 = scmp.eq.s32.totalorder %s20, 7
      %p33 = por %p31, %p32
      %p34 = scmp.ne.s32.totalorder %s25, %s26
      %p35 = scmp.eq.s32.totalorder %s20, 0
      %p36 = por %p34, %p35
      %p37 = scmp.ne.s32.totalorder %s25, %s26
      %p38 = scmp.eq.s32.totalorder %s21, 7
      %p39 = por %p37, %p38
      %p41 = scmp.ne.s32.totalorder %s26, %s40
      %p42 = scmp.eq.s32.totalorder %s21, 0
      %p43 = por %p41, %p42
      %s44 = ssub.s32 %s15, %s22
      %p45 = scmp.eq.s32.totalorder %s44, 0
      %s47 = sadd.s32 %s46, 1
      %s48 = scalar_select %p45, %s46, %s47
      %p51 = pneg %p45
      %p52 = scmp.eq.s32.totalorder %s15, 7
      %p53 = por %p51, %p52
      %p54 = scmp.ne.s32.totalorder %s46, %s49
      %p55 = scmp.eq.s32.totalorder %s15, 0
      %p56 = por %p54, %p55
      %p57 = scmp.ne.s32.totalorder %s46, %s49
      %p58 = scmp.eq.s32.totalorder %s20, 7
      %p59 = por %p57, %p58
      %p60 = scmp.ne.s32.totalorder %s49, %s50
      %p61 = scmp.eq.s32.totalorder %s20, 0
      %p62 = por %p60, %p61
      %p63 = scmp.ne.s32.totalorder %s49, %s50
      %p64 = scmp.eq.s32.totalorder %s21, 7
      %p65 = por %p63, %p64
      %p67 = scmp.ne.s32.totalorder %s50, %s66
      %p68 = scmp.eq.s32.totalorder %s21, 0
      %p69 = por %p67, %p68
      %s70 = ssub.s32 %s15, %s22
      %p71 = scmp.eq.s32.totalorder %s70, 0
      %s73 = sadd.s32 %s72, 1
      %s74 = scalar_select %p71, %s72, %s73
      %p77 = pneg %p71
      %p78 = scmp.eq.s32.totalorder %s15, 7
      %p79 = por %p77, %p78
      %p80 = scmp.ne.s32.totalorder %s72, %s75
      %p81 = scmp.eq.s32.totalorder %s15, 0
      %p82 = por %p80, %p81
      %p83 = scmp.ne.s32.totalorder %s72, %s75
      %p84 = scmp.eq.s32.totalorder %s20, 7
      %p85 = por %p83, %p84
      %p86 = scmp.ne.s32.totalorder %s75, %s76
      %p87 = scmp.eq.s32.totalorder %s20, 0
      %p88 = por %p86, %p87
      %p89 = scmp.ne.s32.totalorder %s75, %s76
      %p90 = scmp.eq.s32.totalorder %s21, 7
      %p91 = por %p89, %p90
      %p93 = scmp.ne.s32.totalorder %s76, %s92
      %p94 = scmp.eq.s32.totalorder %s21, 0
      %p95 = por %p93, %p94
      %p96 = scmp.le.s32.totalorder 1, %s15
      %p97 = scmp.lt.s32.totalorder %s15, 9
      %p98 = pnand %p96, %p97
      %p99 = pneg %p98
      // Predicated region
      $region9: #{tpu_custom_call.1} parent=5 // pred_check
        _
      $region10: #{tpu_custom_call.1} parent=5 // pred_check_branch
        %101 = sbr.rel (%p98) target = $region12
      $region11: #{tpu_custom_call.1} parent=5 // pred_region
        %s102 = ssub.s32 %s15, 1
        // Predicated region
        $region13: #{tpu_custom_call.1} parent=11 // pred_check
          %p103 = pneg %p36
        $region14: #{tpu_custom_call.1} parent=11 // pred_check_branch
          %105 = sbr.rel (%p103) target = $region16
        $region15: #{tpu_custom_call.1} parent=11 // pred_region
          %s107 = ssub.s32 256, 256
          %108 = vsyncadd [#allocation4], %s107
          %s109 = sshll.u32 [#allocation3], 4
          %s110 = int_to_ptr.vmem [resolvable:$true] %s109
          %115 = dma.hbm_to_vmem [thread:$0]  %s0, 256, %s110, [#allocation4], 128, 128, 8
        $region16: #{tpu_custom_call.1} parent=11 // pred_fallthru
          _
      $region12: #{tpu_custom_call.1} parent=5 // pred_fallthru
        _
      %p116 = scmp.lt.s32.totalorder %s15, 8
      // Predicated region
      $region17: #{tpu_custom_call.1} parent=5 // pred_check
        %p117 = pneg %p116
      $region18: #{tpu_custom_call.1} parent=5 // pred_check_branch
        %119 = sbr.rel (%p117) target = $region20
      $region19: #{tpu_custom_call.1} parent=5 // pred_region
        // Predicated region
        $region21: #{tpu_custom_call.1} parent=19 // pred_check
          %p120 = pneg %p56
        $region22: #{tpu_custom_call.1} parent=19 // pred_check_branch
          %122 = sbr.rel (%p120) target = $region24
        $region23: #{tpu_custom_call.1} parent=19 // pred_region
          %s123 = sand.u32 %s46, 1
          %s124 = scalar_lea.sflag [#allocation7], %s123
          %s125 = sand.u32 %s46, 1
          %s126 = smul.addr %s125, 16
          %s127 = scalar_lea.vmem [#allocation6], %s126
          %s129 = ssub.s32 256, 256
          %130 = vsyncadd %s124, %s129
          %s131 = smul.addr %s15, 2
          %s132 = smul.addr %s131, 128
          %s133 = scalar_lea.hbm %s1, %s132
          %s134 = sshll.u32 %s127, 4
          %s135 = int_to_ptr.vmem [resolvable:$true] %s134
          %140 = dma.hbm_to_vmem [thread:$0]  %s133, 256, %s135, %s124, 128, 128, 8
        $region24: #{tpu_custom_call.1} parent=19 // pred_fallthru
          _
      $region20: #{tpu_custom_call.1} parent=5 // pred_fallthru
        _
      %p141 = scmp.le.s32.totalorder 1, %s15
      %p142 = scmp.lt.s32.totalorder %s15, 9
      %p143 = pnand %p141, %p142
      %p144 = pneg %p143
      // Predicated region
      $region25: #{tpu_custom_call.1} parent=5 // pred_check
        _
      $region26: #{tpu_custom_call.1} parent=5 // pred_check_branch
        %146 = sbr.rel (%p143) target = $region28
      $region27: #{tpu_custom_call.1} parent=5 // pred_region
        %s147 = ssub.s32 %s15, 1
        // Predicated region
        $region29: #{tpu_custom_call.1} parent=27 // pred_check
          %p148 = pneg %p36
        $region30: #{tpu_custom_call.1} parent=27 // pred_check_branch
          %150 = sbr.rel (%p148) target = $region32
        $region31: #{tpu_custom_call.1} parent=27 // pred_region
          %151 = dma.done [#allocation4], 256
        $region32: #{tpu_custom_call.1} parent=27 // pred_fallthru
          _
        %s152 = sand.u32 %s49, 1
        %s153 = scalar_lea.sflag [#allocation7], %s152
        %s154 = sand.u32 %s49, 1
        %s155 = smul.addr %s154, 16
        %s156 = scalar_lea.vmem [#allocation6], %s155
        // Predicated region
        $region33: #{tpu_custom_call.1} parent=27 // pred_check
          %p157 = pneg %p62
        $region34: #{tpu_custom_call.1} parent=27 // pred_check_branch
          %159 = sbr.rel (%p157) target = $region36
        $region35: #{tpu_custom_call.1} parent=27 // pred_region
          %160 = dma.done %s153, 256
        $region36: #{tpu_custom_call.1} parent=27 // pred_fallthru
          _
        %p161 = pneg %p36
        %p162 = pneg %p33
        %s163 = sand.u32 %s49, 1
        %s164 = scalar_lea.sflag [#allocation7], %s163
        %s165 = sand.u32 %s49, 1
        %s166 = smul.addr %s165, 16
        %s167 = scalar_lea.vmem [#allocation6], %s166
        %p168 = pneg %p62
        %p169 = pneg %p59
        %p170 = pneg %p88
        %p171 = pneg %p85
        %s172 = sand.u32 %s75, 1
        %s173 = scalar_lea.sflag [#allocation5], %s172
        %s174 = sand.u32 %s75, 1
        %s175 = smul.addr %s174, 8
        %s176 = scalar_lea.vmem [#allocation8], %s175
        %s177 = scalar_lea.vmem %s156, 1 [#allocation6]
        %v178 = vld [vmem:[%s177] ss:$2 sm:$0x7f]
        %v179 = vmul.f32 %v178, 0.25
        %s180 = scalar_lea.vmem %s156, 2 [#allocation6]
        %v181 = vld [vmem:[%s180] ss:$2 sm:$0x7f]
        %v182 = vmul.f32 %v181, 0.5
        %v183 = vadd.f32 %v179, %v182
        %s184 = scalar_lea.vmem %s156, 3 [#allocation6]
        %v185 = vld [vmem:[%s184] ss:$2 sm:$0x7f]
        %v186 = vmul.f32 %v185, 0.25
        %v187 = vadd.f32 %v183, %v186
        %vm188 = vcmask 129024
        %189 = vst.msk [vmem:[#allocation2 + $0x1] sm:$0x7f] %vm188, %v187
        %v190 = vld [vmem:[%s156] sm:$0x1]
        %v191 = vmul.f32 %v190, 0.5
        %v192 = vld [vmem:[%s156 + $0x1] sm:$0x1]
        %v193 = vmul.f32 %v192, 0.5
        %v194 = vadd.f32 %v191, %v193
        %vm195 = vcmask 122880
        %196 = vst.msk [vmem:[#allocation2] sm:$0x1] %vm195, %v194
        %v197 = vld [vmem:[#allocation2] sm:$0xff]
        %v198 = vld [vmem:[#allocation3] sm:$0xff]
        %v199 = vld [vmem:[#allocation3 + $0x8] sm:$0xff]
        %vm200 = vcmask 130048
        %v202 = vsel %vm200, %v197, 0
        %204 = vmatprep.subr.mxu0 0.0
        %205 = vmatpush1.msra.mxu0 %v198
        %206 = vmatprep.subr.mxu0 0.0
        %207 = vmatpush1.msra.mxu0 %v199
        %208 = vmatprep.subr.mxu0 0.0
        %209 = vmatpush1.msra.mxu0 0.0
        %210 = vmatprep.subr.mxu0 0.0
        %211 = vmatpush1.msra.mxu0 0.0
        %212 = vmatprep.subr.mxu0 0.0
        %213 = vmatpush1.msra.mxu0 0.0
        %214 = vmatprep.subr.mxu0 0.0
        %215 = vmatpush1.msra.mxu0 0.0
        %216 = vmatprep.subr.mxu0 0.0
        %217 = vmatpush1.msra.mxu0 0.0
        %218 = vmatprep.subr.mxu0 0.0
        %219 = vmatpush1.msra.mxu0 0.0
        %220 = vmatprep.subr.mxu0 0.0
        %221 = vmatpush1.msra.mxu0 0.0
        %222 = vmatprep.subr.mxu0 0.0
        %223 = vmatpush1.msra.mxu0 0.0
        %224 = vmatprep.subr.mxu0 0.0
        %225 = vmatpush1.msra.mxu0 0.0
        %226 = vmatprep.subr.mxu0 0.0
        %227 = vmatpush1.msra.mxu0 0.0
        %228 = vmatprep.subr.mxu0 0.0
        %229 = vmatpush1.msra.mxu0 0.0
        %230 = vmatprep.subr.mxu0 0.0
        %231 = vmatpush1.msra.mxu0 0.0
        %232 = vmatprep.subr.mxu0 0.0
        %233 = vmatpush1.msra.mxu0 0.0
        %234 = vmatprep.subr.mxu0 0.0
        %235 = vmatpush1.msra.mxu0 0.0
        %236 = vmatprep.subr.mxu0 0.0
        %237 = vmatpush1.msra.mxu0 0.0
        %238 = vmatprep.subr.mxu0 0.0
        %239 = vmatpush1.msra.mxu0 0.0
        %240 = vmatprep.subr.mxu0 0.0
        %241 = vmatpush1.msra.mxu0 0.0
        %242 = vmatprep.subr.mxu0 0.0
        %243 = vmatpush1.msra.mxu0 0.0
        %244 = vmatprep.subr.mxu0 0.0
        %245 = vmatpush1.msra.mxu0 0.0
        %246 = vmatprep.subr.mxu0 0.0
        %247 = vmatpush1.msra.mxu0 0.0
        %248 = vmatprep.subr.mxu0 0.0
        %249 = vmatpush1.msra.mxu0 0.0
        %250 = vmatprep.subr.mxu0 0.0
        %251 = vmatpush1.msra.mxu0 0.0
        %252 = vmatprep.subr.mxu0 0.0
        %253 = vmatpush1.msra.mxu0 0.0
        %254 = vmatprep.subr.mxu0 0.0
        %255 = vmatpush1.msra.mxu0 0.0
        %256 = vmatprep.subr.mxu0 0.0
        %257 = vmatpush1.msra.mxu0 0.0
        %258 = vmatprep.subr.mxu0 0.0
        %259 = vmatpush1.msra.mxu0 0.0
        %260 = vmatprep.subr.mxu0 0.0
        %261 = vmatpush1.msra.mxu0 0.0
        %262 = vmatprep.subr.mxu0 0.0
        %263 = vmatpush1.msra.mxu0 0.0
        %264 = vmatprep.subr.mxu0 0.0
        %265 = vmatpush1.msra.mxu0 0.0
        %266 = vmatprep.subr.mxu0 0.0
        %267 = vmatpush1.msra.mxu0 0.0
        %268 = vmatprep.mubr.f32.mxu0 0.0
        %269 = vmatmul.mubr.f32.gmra.mrb[0].mxu0 %v202
        %v270 = vpop.f32.mrb[0].mxu0
        %v271 = vadd.f32 0.0, %v270
        %v272 = vpop.f32.mrb[0].mxu0
        %273 = vdwg.mxu0
        %274 = vst [vmem:[%s176] sm:$0xff] %v271
        %s275 = sand.u32 %s75, 1
        %s276 = scalar_lea.sflag [#allocation5], %s275
        %s277 = sand.u32 %s75, 1
        %s278 = smul.addr %s277, 8
        %s279 = scalar_lea.vmem [#allocation8], %s278
        // Predicated region
        $region37: #{tpu_custom_call.1} parent=27 // pred_check
          %p280 = pneg %p85
        $region38: #{tpu_custom_call.1} parent=27 // pred_check_branch
          %282 = sbr.rel (%p280) target = $region40
        $region39: #{tpu_custom_call.1} parent=27 // pred_region
          %s284 = ssub.s32 128, 128
          %285 = vsyncadd %s276, %s284
          %s286 = smul.addr %s20, 128
          %s287 = scalar_lea.hbm %s2, %s286
          %s289 = sshll.u32 %s279, 4
          %s290 = int_to_ptr.vmem [resolvable:$true] %s289
          %292 = dma.vmem_to_hbm [thread:$0]  %s290, 128, %s287, %s276
        $region40: #{tpu_custom_call.1} parent=27 // pred_fallthru
          _
      $region28: #{tpu_custom_call.1} parent=5 // pred_fallthru
        _
      %p293 = scmp.le.s32.totalorder 2, %s15
      // Predicated region
      $region41: #{tpu_custom_call.1} parent=5 // pred_check
        %p294 = pneg %p293
      $region42: #{tpu_custom_call.1} parent=5 // pred_check_branch
        %296 = sbr.rel (%p294) target = $region44
      $region43: #{tpu_custom_call.1} parent=5 // pred_region
        %s297 = ssub.s32 %s15, 2
        // Predicated region
        $region45: #{tpu_custom_call.1} parent=43 // pred_check
          %p298 = pneg %p91
        $region46: #{tpu_custom_call.1} parent=43 // pred_check_branch
          %300 = sbr.rel (%p298) target = $region48
        $region47: #{tpu_custom_call.1} parent=43 // pred_region
          %s301 = sand.u32 %s76, 1
          %s302 = scalar_lea.sflag [#allocation5], %s301
          %s303 = sand.u32 %s76, 1
          %s304 = smul.addr %s303, 8
          %s305 = scalar_lea.vmem [#allocation8], %s304
          %306 = dma.done %s302, 128
        $region48: #{tpu_custom_call.1} parent=43 // pred_fallthru
          _
      $region44: #{tpu_custom_call.1} parent=5 // pred_fallthru
        _
    $region6: #{tpu_custom_call.1} parent=1 // loop_footer
      %s19 = sadd.s32 1, %s15
    $region7: #{tpu_custom_call.1} parent=1 // loop_footer_branch
      %14 = sbr.rel target = $region3
    $region8: #{tpu_custom_call.1} parent=1 // loop_exit
      _
    %307 = vsyncpa [#allocation4], 1
    %s308 = scalar_lea.sflag [#allocation4], 1
    %309 = vsyncpa %s308, 1
    %310 = vsyncpa [#allocation7], 1
    %s311 = scalar_lea.sflag [#allocation7], 1
    %312 = vsyncpa %s311, 1
    %313 = vsyncpa [#allocation5], 1
    %s314 = scalar_lea.sflag [#allocation5], 1
    %315 = vsyncpa %s314, 1

// kernel: tpu_custom_call.1
$region0: #{tpu_custom_call.1}
  #allocation0 [shape = 'u32[]', space=smem, size = 0x4, offset = 0x4, fixed_abs, tag = 'smem constant byte address 0x4 - core index']
  #allocation1 [shape = 'u32[144,128]{1,0:T(1,128)}', space=vmem, size = 0x12000, scoped, tag = 'internal scratch']
  #allocation2 [shape = 'f32[1,8,16]{2,1,0:T(8,128)}', space=vmem, size = 0x1000, scoped, tag = 'scratch operand']
  %s0 = inlined_call_operand.hbm [shape: f32[16,128], index: 0, kind: input, shape index: {}]
  %s1 = inlined_call_operand.hbm [shape: f32[8,16,16], index: 1, kind: input, shape index: {}]
  %s2 = inlined_call_operand.hbm [shape: f32[8,8,128], index: 2, kind: output, shape index: {}]
  %s3 = sld [smem:[#allocation0]]
  $region49: #{tpu_custom_call.1} parent=0
    _
  %s5 = ssub.s32 1, %s3
  %s6 = scalar_select 0, %s5, %s3
  $region1: #{tpu_custom_call.1} parent=0
    #allocation3 [shape = 'u8[8192]{0}', space=vmem, size = 0x2000, scoped, tag = 'input window, operand 0, single buffered']
    #allocation4 [shape = 's32[2]{0}', space=sflag, size = 0x8, scoped, tag = 'scoped memory for tpu_custom_call.1']
    #allocation5 [shape = 's32[2]{0}', space=sflag, size = 0x8, scoped, tag = 'scoped memory for tpu_custom_call.1']
    #allocation6 [shape = 'u8[16384]{0}', space=vmem, size = 0x4000, scoped, tag = 'input window, operand 1']
    #allocation7 [shape = 's32[2]{0}', space=sflag, size = 0x8, scoped, tag = 'scoped memory for tpu_custom_call.1']
    #allocation8 [shape = 'u8[8192]{0}', space=vmem, size = 0x2000, scoped, tag = 'output window, operand 0']
    %7 = vsyncpa [#allocation4], 0
    %8 = vsyncpa [#allocation7], 0
    %s9 = scalar_lea.sflag [#allocation7], 1
    %10 = vsyncpa %s9, 0
    %11 = vsyncpa [#allocation5], 0
    %s12 = scalar_lea.sflag [#allocation5], 1
    %13 = vsyncpa %s12, 0
    loop: start=0, step=1, limit=10
    $region2: #{tpu_custom_call.1} parent=1 // loop_pre_header
      _
    $region3: #{tpu_custom_call.1} parent=1 // loop_header
      %s15 = sphi 0, %s19
      %p16 = scmp.ge.s32.totalorder %s15, 10
      %s23 = sphi 0, %s23
      %s25 = sphi 0, %s23
      %s26 = sphi 0, %s25
      %s40 = sphi 0, %s26
      %s46 = sphi 0, %s48
      %s49 = sphi 0, %s46
      %s50 = sphi 0, %s49
      %s66 = sphi 0, %s50
      %s72 = sphi 0, %s74
      %s75 = sphi 0, %s72
      %s76 = sphi 0, %s75
      %s92 = sphi 0, %s76
    $region4: #{tpu_custom_call.1} parent=1 // loop_header_branch
      %18 = sbr.rel (%p16) target = $region8
    $region5: #{tpu_custom_call.1} parent=1 // loop_body
      %s20 = ssub.s32 %s15, 1
      %s21 = ssub.s32 %s15, 2
      %s22 = sadd.s32 %s15, 1
      %s24 = sadd.s32 %s23, 1
      %p27 = scmp.eq.s32.totalorder %s15, 7
      %p28 = scmp.ne.s32.totalorder %s23, %s25
      %p29 = scmp.eq.s32.totalorder %s15, 0
      %p30 = por %p28, %p29
      %p31 = scmp.ne.s32.totalorder %s23, %s25
      %p32 = scmp.eq.s32.totalorder %s20, 7
      %p33 = por %p31, %p32
      %p34 = scmp.ne.s32.totalorder %s25, %s26
      %p35 = scmp.eq.s32.totalorder %s20, 0
      %p36 = por %p34, %p35
      %p37 = scmp.ne.s32.totalorder %s25, %s26
      %p38 = scmp.eq.s32.totalorder %s21, 7
      %p39 = por %p37, %p38
      %p41 = scmp.ne.s32.totalorder %s26, %s40
      %p42 = scmp.eq.s32.totalorder %s21, 0
      %p43 = por %p41, %p42
      %s44 = ssub.s32 %s15, %s22
      %p45 = scmp.eq.s32.totalorder %s44, 0
      %s47 = sadd.s32 %s46, 1
      %s48 = scalar_select %p45, %s46, %s47
      %p51 = pneg %p45
      %p52 = scmp.eq.s32.totalorder %s15, 7
      %p53 = por %p51, %p52
      %p54 = scmp.ne.s32.totalorder %s46, %s49
      %p55 = scmp.eq.s32.totalorder %s15, 0
      %p56 = por %p54, %p55
      %p57 = scmp.ne.s32.totalorder %s46, %s49
      %p58 = scmp.eq.s32.totalorder %s20, 7
      %p59 = por %p57, %p58
      %p60 = scmp.ne.s32.totalorder %s49, %s50
      %p61 = scmp.eq.s32.totalorder %s20, 0
      %p62 = por %p60, %p61
      %p63 = scmp.ne.s32.totalorder %s49, %s50
      %p64 = scmp.eq.s32.totalorder %s21, 7
      %p65 = por %p63, %p64
      %p67 = scmp.ne.s32.totalorder %s50, %s66
      %p68 = scmp.eq.s32.totalorder %s21, 0
      %p69 = por %p67, %p68
      %s70 = ssub.s32 %s15, %s22
      %p71 = scmp.eq.s32.totalorder %s70, 0
      %s73 = sadd.s32 %s72, 1
      %s74 = scalar_select %p71, %s72, %s73
      %p77 = pneg %p71
      %p78 = scmp.eq.s32.totalorder %s15, 7
      %p79 = por %p77, %p78
      %p80 = scmp.ne.s32.totalorder %s72, %s75
      %p81 = scmp.eq.s32.totalorder %s15, 0
      %p82 = por %p80, %p81
      %p83 = scmp.ne.s32.totalorder %s72, %s75
      %p84 = scmp.eq.s32.totalorder %s20, 7
      %p85 = por %p83, %p84
      %p86 = scmp.ne.s32.totalorder %s75, %s76
      %p87 = scmp.eq.s32.totalorder %s20, 0
      %p88 = por %p86, %p87
      %p89 = scmp.ne.s32.totalorder %s75, %s76
      %p90 = scmp.eq.s32.totalorder %s21, 7
      %p91 = por %p89, %p90
      %p93 = scmp.ne.s32.totalorder %s76, %s92
      %p94 = scmp.eq.s32.totalorder %s21, 0
      %p95 = por %p93, %p94
      %p96 = scmp.le.s32.totalorder 1, %s15
      %p97 = scmp.lt.s32.totalorder %s15, 9
      %p98 = pnand %p96, %p97
      %p99 = pneg %p98
      // Predicated region
      $region9: #{tpu_custom_call.1} parent=5 // pred_check
        _
      $region10: #{tpu_custom_call.1} parent=5 // pred_check_branch
        %101 = sbr.rel (%p98) target = $region12
      $region11: #{tpu_custom_call.1} parent=5 // pred_region
        %s102 = ssub.s32 %s15, 1
        // Predicated region
        $region13: #{tpu_custom_call.1} parent=11 // pred_check
          %p103 = pneg %p36
        $region14: #{tpu_custom_call.1} parent=11 // pred_check_branch
          %105 = sbr.rel (%p103) target = $region16
        $region15: #{tpu_custom_call.1} parent=11 // pred_region
          %s107 = ssub.s32 256, 256
          %108 = vsyncadd [#allocation4], %s107
          %s109 = sshll.u32 [#allocation3], 4
          %s110 = int_to_ptr.vmem [resolvable:$true] %s109
          %115 = dma.hbm_to_vmem [thread:$0]  %s0, 256, %s110, [#allocation4], 128, 128, 8
        $region16: #{tpu_custom_call.1} parent=11 // pred_fallthru
          _
      $region12: #{tpu_custom_call.1} parent=5 // pred_fallthru
        _
      %p116 = scmp.lt.s32.totalorder %s15, 8
      // Predicated region
      $region17: #{tpu_custom_call.1} parent=5 // pred_check
        %p117 = pneg %p116
      $region18: #{tpu_custom_call.1} parent=5 // pred_check_branch
        %119 = sbr.rel (%p117) target = $region20
      $region19: #{tpu_custom_call.1} parent=5 // pred_region
        // Predicated region
        $region21: #{tpu_custom_call.1} parent=19 // pred_check
          %p120 = pneg %p56
        $region22: #{tpu_custom_call.1} parent=19 // pred_check_branch
          %122 = sbr.rel (%p120) target = $region24
        $region23: #{tpu_custom_call.1} parent=19 // pred_region
          %s123 = sand.u32 %s46, 1
          %s124 = scalar_lea.sflag [#allocation7], %s123
          %s125 = sand.u32 %s46, 1
          %s126 = smul.addr %s125, 16
          %s127 = scalar_lea.vmem [#allocation6], %s126
          %s129 = ssub.s32 256, 256
          %130 = vsyncadd %s124, %s129
          %s131 = smul.addr %s15, 2
          %s132 = smul.addr %s131, 128
          %s133 = scalar_lea.hbm %s1, %s132
          %s134 = sshll.u32 %s127, 4
          %s135 = int_to_ptr.vmem [resolvable:$true] %s134
          %140 = dma.hbm_to_vmem [thread:$0]  %s133, 256, %s135, %s124, 128, 128, 8
        $region24: #{tpu_custom_call.1} parent=19 // pred_fallthru
          _
      $region20: #{tpu_custom_call.1} parent=5 // pred_fallthru
        _
      %p141 = scmp.le.s32.totalorder 1, %s15
      %p142 = scmp.lt.s32.totalorder %s15, 9
      %p143 = pnand %p141, %p142
      %p144 = pneg %p143
      // Predicated region
      $region25: #{tpu_custom_call.1} parent=5 // pred_check
        _
      $region26: #{tpu_custom_call.1} parent=5 // pred_check_branch
        %146 = sbr.rel (%p143) target = $region28
      $region27: #{tpu_custom_call.1} parent=5 // pred_region
        %s147 = ssub.s32 %s15, 1
        // Predicated region
        $region29: #{tpu_custom_call.1} parent=27 // pred_check
          %p148 = pneg %p36
        $region30: #{tpu_custom_call.1} parent=27 // pred_check_branch
          %150 = sbr.rel (%p148) target = $region32
        $region31: #{tpu_custom_call.1} parent=27 // pred_region
          %151 = dma.done [#allocation4], 256
        $region32: #{tpu_custom_call.1} parent=27 // pred_fallthru
          _
        %s152 = sand.u32 %s49, 1
        %s153 = scalar_lea.sflag [#allocation7], %s152
        %s154 = sand.u32 %s49, 1
        %s155 = smul.addr %s154, 16
        %s156 = scalar_lea.vmem [#allocation6], %s155
        // Predicated region
        $region33: #{tpu_custom_call.1} parent=27 // pred_check
          %p157 = pneg %p62
        $region34: #{tpu_custom_call.1} parent=27 // pred_check_branch
          %159 = sbr.rel (%p157) target = $region36
        $region35: #{tpu_custom_call.1} parent=27 // pred_region
          %160 = dma.done %s153, 256
        $region36: #{tpu_custom_call.1} parent=27 // pred_fallthru
          _
        %p161 = pneg %p36
        %p162 = pneg %p33
        %s163 = sand.u32 %s49, 1
        %s164 = scalar_lea.sflag [#allocation7], %s163
        %s165 = sand.u32 %s49, 1
        %s166 = smul.addr %s165, 16
        %s167 = scalar_lea.vmem [#allocation6], %s166
        %p168 = pneg %p62
        %p169 = pneg %p59
        %p170 = pneg %p88
        %p171 = pneg %p85
        %s172 = sand.u32 %s75, 1
        %s173 = scalar_lea.sflag [#allocation5], %s172
        %s174 = sand.u32 %s75, 1
        %s175 = smul.addr %s174, 8
        %s176 = scalar_lea.vmem [#allocation8], %s175
        %s177 = scalar_lea.vmem %s156, 1 [#allocation6]
        %v178 = vld [vmem:[%s177] ss:$2 sm:$0x7f]
        %v179 = vmul.f32 %v178, 0.25
        %s180 = scalar_lea.vmem %s156, 2 [#allocation6]
        %v181 = vld [vmem:[%s180] ss:$2 sm:$0x7f]
        %v182 = vmul.f32 %v181, 0.5
        %v183 = vadd.f32 %v179, %v182
        %s184 = scalar_lea.vmem %s156, 3 [#allocation6]
        %v185 = vld [vmem:[%s184] ss:$2 sm:$0x7f]
        %v186 = vmul.f32 %v185, 0.25
        %v187 = vadd.f32 %v183, %v186
        %vm188 = vcmask 129024
        %189 = vst.msk [vmem:[#allocation2 + $0x1] sm:$0x7f] %vm188, %v187
        %v190 = vld [vmem:[%s156] sm:$0x1]
        %v191 = vmul.f32 %v190, 0.5
        %v192 = vld [vmem:[%s156 + $0x1] sm:$0x1]
        %v193 = vmul.f32 %v192, 0.5
        %v194 = vadd.f32 %v191, %v193
        %vm195 = vcmask 122880
        %196 = vst.msk [vmem:[#allocation2] sm:$0x1] %vm195, %v194
        %v197 = vld [vmem:[#allocation2] sm:$0xff]
        %v198 = vld [vmem:[#allocation3] sm:$0xff]
        %v199 = vld [vmem:[#allocation3 + $0x8] sm:$0xff]
        %vm200 = vcmask 130048
        %v202 = vsel %vm200, %v197, 0
        %204 = vmatprep.subr.mxu0 0.0
        %205 = vmatpush1.msra.mxu0 %v198
        %206 = vmatprep.subr.mxu0 0.0
        %207 = vmatpush1.msra.mxu0 %v199
        %208 = vmatprep.subr.mxu0 0.0
        %209 = vmatpush1.msra.mxu0 0.0
        %210 = vmatprep.subr.mxu0 0.0
        %211 = vmatpush1.msra.mxu0 0.0
        %212 = vmatprep.subr.mxu0 0.0
        %213 = vmatpush1.msra.mxu0 0.0
        %214 = vmatprep.subr.mxu0 0.0
        %215 = vmatpush1.msra.mxu0 0.0
        %216 = vmatprep.subr.mxu0 0.0
        %217 = vmatpush1.msra.mxu0 0.0
        %218 = vmatprep.subr.mxu0 0.0
        %219 = vmatpush1.msra.mxu0 0.0
        %220 = vmatprep.subr.mxu0 0.0
        %221 = vmatpush1.msra.mxu0 0.0
        %222 = vmatprep.subr.mxu0 0.0
        %223 = vmatpush1.msra.mxu0 0.0
        %224 = vmatprep.subr.mxu0 0.0
        %225 = vmatpush1.msra.mxu0 0.0
        %226 = vmatprep.subr.mxu0 0.0
        %227 = vmatpush1.msra.mxu0 0.0
        %228 = vmatprep.subr.mxu0 0.0
        %229 = vmatpush1.msra.mxu0 0.0
        %230 = vmatprep.subr.mxu0 0.0
        %231 = vmatpush1.msra.mxu0 0.0
        %232 = vmatprep.subr.mxu0 0.0
        %233 = vmatpush1.msra.mxu0 0.0
        %234 = vmatprep.subr.mxu0 0.0
        %235 = vmatpush1.msra.mxu0 0.0
        %236 = vmatprep.subr.mxu0 0.0
        %237 = vmatpush1.msra.mxu0 0.0
        %238 = vmatprep.subr.mxu0 0.0
        %239 = vmatpush1.msra.mxu0 0.0
        %240 = vmatprep.subr.mxu0 0.0
        %241 = vmatpush1.msra.mxu0 0.0
        %242 = vmatprep.subr.mxu0 0.0
        %243 = vmatpush1.msra.mxu0 0.0
        %244 = vmatprep.subr.mxu0 0.0
        %245 = vmatpush1.msra.mxu0 0.0
        %246 = vmatprep.subr.mxu0 0.0
        %247 = vmatpush1.msra.mxu0 0.0
        %248 = vmatprep.subr.mxu0 0.0
        %249 = vmatpush1.msra.mxu0 0.0
        %250 = vmatprep.subr.mxu0 0.0
        %251 = vmatpush1.msra.mxu0 0.0
        %252 = vmatprep.subr.mxu0 0.0
        %253 = vmatpush1.msra.mxu0 0.0
        %254 = vmatprep.subr.mxu0 0.0
        %255 = vmatpush1.msra.mxu0 0.0
        %256 = vmatprep.subr.mxu0 0.0
        %257 = vmatpush1.msra.mxu0 0.0
        %258 = vmatprep.subr.mxu0 0.0
        %259 = vmatpush1.msra.mxu0 0.0
        %260 = vmatprep.subr.mxu0 0.0
        %261 = vmatpush1.msra.mxu0 0.0
        %262 = vmatprep.subr.mxu0 0.0
        %263 = vmatpush1.msra.mxu0 0.0
        %264 = vmatprep.subr.mxu0 0.0
        %265 = vmatpush1.msra.mxu0 0.0
        %266 = vmatprep.subr.mxu0 0.0
        %267 = vmatpush1.msra.mxu0 0.0
        %268 = vmatprep.mubr.f32.mxu0 0.0
        %269 = vmatmul.mubr.f32.gmra.mrb[0].mxu0 %v202
        %v270 = vpop.f32.mrb[0].mxu0
        %v271 = vadd.f32 0.0, %v270
        %v272 = vpop.f32.mrb[0].mxu0
        %273 = vdwg.mxu0
        %274 = vst [vmem:[%s176] sm:$0xff] %v271
        %s275 = sand.u32 %s75, 1
        %s276 = scalar_lea.sflag [#allocation5], %s275
        %s277 = sand.u32 %s75, 1
        %s278 = smul.addr %s277, 8
        %s279 = scalar_lea.vmem [#allocation8], %s278
        // Predicated region
        $region37: #{tpu_custom_call.1} parent=27 // pred_check
          %p280 = pneg %p85
        $region38: #{tpu_custom_call.1} parent=27 // pred_check_branch
          %282 = sbr.rel (%p280) target = $region40
        $region39: #{tpu_custom_call.1} parent=27 // pred_region
          %s284 = ssub.s32 128, 128
          %285 = vsyncadd %s276, %s284
          %s286 = smul.addr %s20, 128
          %s287 = scalar_lea.hbm %s2, %s286
          %s289 = sshll.u32 %s279, 4
          %s290 = int_to_ptr.vmem [resolvable:$true] %s289
          %292 = dma.vmem_to_hbm [thread:$0]  %s290, 128, %s287, %s276
        $region40: #{tpu_custom_call.1} parent=27 // pred_fallthru
          _
      $region28: #{tpu_custom_call.1} parent=5 // pred_fallthru
        _
      %p293 = scmp.le.s32.totalorder 2, %s15
      // Predicated region
      $region41: #{tpu_custom_call.1} parent=5 // pred_check
        %p294 = pneg %p293
      $region42: #{tpu_custom_call.1} parent=5 // pred_check_branch
        %296 = sbr.rel (%p294) target = $region44
      $region43: #{tpu_custom_call.1} parent=5 // pred_region
        %s297 = ssub.s32 %s15, 2
        // Predicated region
        $region45: #{tpu_custom_call.1} parent=43 // pred_check
          %p298 = pneg %p91
        $region46: #{tpu_custom_call.1} parent=43 // pred_check_branch
          %300 = sbr.rel (%p298) target = $region48
        $region47: #{tpu_custom_call.1} parent=43 // pred_region
          %s301 = sand.u32 %s76, 1
          %s302 = scalar_lea.sflag [#allocation5], %s301
          %s303 = sand.u32 %s76, 1
          %s304 = smul.addr %s303, 8
          %s305 = scalar_lea.vmem [#allocation8], %s304
          %306 = dma.done %s302, 128
        $region48: #{tpu_custom_call.1} parent=43 // pred_fallthru
          _
      $region44: #{tpu_custom_call.1} parent=5 // pred_fallthru
        _
    $region6: #{tpu_custom_call.1} parent=1 // loop_footer
      %s19 = sadd.s32 1, %s15
    $region7: #{tpu_custom_call.1} parent=1 // loop_footer_branch
      %14 = sbr.rel target = $region3
    $region8: #{tpu_custom_call.1} parent=1 // loop_exit
      _
    %307 = vsyncpa [#allocation4], 1
    %s308 = scalar_lea.sflag [#allocation4], 1
    %309 = vsyncpa %s308, 1
    %310 = vsyncpa [#allocation7], 1
    %s311 = scalar_lea.sflag [#allocation7], 1
    %312 = vsyncpa %s311, 1
    %313 = vsyncpa [#allocation5], 1
    %s314 = scalar_lea.sflag [#allocation5], 1
    %315 = vsyncpa %s314, 1

</llo_original>
